<compile_context>
chip_gen: v7x
topology: tpu7x:2x2x1
jax: 0.10.0
libtpu: 0.0.40
codegen_flags: <defaults>
</compile_context>

<pallas_src>
import jax
import jax.numpy as jnp
from jax.experimental import pallas as pl
from jax.experimental.pallas import tpu as pltpu


def _round_up(n, m):
    return ((n + m - 1) // m) * m


# ---------------------------------------------------------------------------
# Kernel
# ---------------------------------------------------------------------------
def dan_kernel(x_ref, w1_ref, b1_ref, w2_ref, b2_ref, o_ref):
    # dense1: cast the streamed x tile to bf16 *in-kernel* (no extra HBM pass),
    # bf16 MXU matmul with f32 accumulation; bias + ReLU in f32.
    x = x_ref[...].astype(jnp.bfloat16)
    h = jnp.dot(x, w1_ref[...], preferred_element_type=jnp.float32)
    h = jnp.maximum(h + b1_ref[...], 0.0)            # b1 is (1, hid_p) -> broadcasts

    # dense2: back to bf16 for the MXU, f32 accumulate, f32 epilogue.
    logits = jnp.dot(h.astype(jnp.bfloat16), w2_ref[...],
                     preferred_element_type=jnp.float32) + b2_ref[...]

    # Numerically stable log_softmax over the class axis (PyTorch dim=1).
    # Output columns are NOT padded, so no masking is needed here.
    m = jnp.max(logits, axis=-1, keepdims=True)
    shifted = logits - m
    lse = jnp.log(jnp.sum(jnp.exp(shifted), axis=-1, keepdims=True))
    o_ref[...] = (shifted - lse).astype(o_ref.dtype)


# ---------------------------------------------------------------------------
# Parameter prep (run ONCE, outside the per-call path)
# ---------------------------------------------------------------------------
def prepare_dan_params(w1, b1, w2, b2):
    """Pad hid to a lane-dense multiple of 128 and cast weights to bf16, once.

    w1: (inp, hid)  -> (inp, hid_p) bf16
    b1: (1, hid)    -> (1, hid_p)   f32
    w2: (hid, op)   -> (hid_p, op)  bf16   (padded rows are zero -> no effect)
    b2: (1, op)     -> (1, op)      f32
    """
    inp, hid = w1.shape
    op = w2.shape[1]
    hid_p = _round_up(hid, 128)
    w1p = jnp.pad(w1, ((0, 0), (0, hid_p - hid))).astype(jnp.bfloat16)
    b1p = jnp.pad(b1.reshape(1, hid).astype(jnp.float32),
                  ((0, 0), (0, hid_p - hid)))
    w2p = jnp.pad(w2, ((0, hid_p - hid), (0, 0))).astype(jnp.bfloat16)
    b2p = b2.reshape(1, op).astype(jnp.float32)
    return w1p, b1p, w2p, b2p


# ---------------------------------------------------------------------------
# Tiling / VMEM budgeting
# ---------------------------------------------------------------------------
def _auto_tile(B, inp, hid_p, op, x_itemsize):
    """Pick a batch tile and a VMEM limit from the chip's VMEM capacity."""
    try:
        vmem_cap = int(pltpu.get_tpu_info().vmem_capacity_bytes)
    except Exception:
        vmem_cap = 64 << 20                       # conservative: v7x per-TC VMEM
    vmem_cap = max(vmem_cap, 32 << 20)

    budget = min(vmem_cap // 2, 48 << 20)         # bytes we aim to keep resident
    vmem_limit = int(min(vmem_cap - (8 << 20), budget + (16 << 20)))

    # VMEM-resident (single-buffered) weights / biases.
    fixed = inp * hid_p * 2 + hid_p * op * 2 + hid_p * 4 + op * 4
    # Per-batch-row bytes: x (double-buffered, own dtype) + in-kernel bf16 copy
    # + h (f32 + bf16) + logits (f32) + out (double-buffered f32).
    per_row = (2 * inp * x_itemsize + inp * 2 + hid_p * 6 + op * 4 + 2 * op * 4)

    # TODO(synk): for very large inp, add a K(=inp) grid axis ("arbitrary") with
    # an f32 accumulator scratch instead of clamping tile_b down here.
    tile_rows = (budget - fixed) // max(per_row, 1)
    tile_b = min(1024, tile_rows, _round_up(B, 8))
    tile_b = max(8, (tile_b // 8) * 8)

    # v7x has 2 TensorCores: make sure the "parallel" batch axis has >= 2 steps.
    if -(-B // tile_b) == 1 and B > 8:
        tile_b = max(8, _round_up(-(-B // 2), 8))
    return tile_b, vmem_limit


def _resident_spec(shape):
    """Constant-index_map operand: lives in VMEM for the whole grid.
    Single-buffer it to halve its VMEM footprint (it never changes)."""
    try:
        return pl.BlockSpec(shape, lambda i: (0, 0), pipeline_mode=pl.Buffered(1))
    except Exception:  # older JAX without pipeline_mode / Buffered
        return pl.BlockSpec(shape, lambda i: (0, 0))


# ---------------------------------------------------------------------------
# Forward
# ---------------------------------------------------------------------------
def dan_forward(x, w1p, b1p, w2p, b2p, *, tile_b=None):
    """x: (B, inp) f32/bf16; (w1p, b1p, w2p, b2p) from prepare_dan_params()."""
    B, inp = x.shape
    hid_p = w1p.shape[1]
    op = w2p.shape[1]

    auto_tile_b, vmem_limit = _auto_tile(B, inp, hid_p, op, x.dtype.itemsize)
    if tile_b is None:
        tile_b = auto_tile_b
    else:
        tile_b = max(8, (min(tile_b, _round_up(B, 8)) // 8) * 8)

    cost = pl.CostEstimate(
        flops=2 * B * (inp * hid_p + hid_p * op),
        transcendentals=B * op,
        bytes_accessed=(x.size * x.dtype.itemsize
                        + w1p.size * 2 + w2p.size * 2
                        + b1p.size * 4 + b2p.size * 4
                        + B * op * 4),
    )

    out = pl.pallas_call(
        dan_kernel,
        out_shape=jax.ShapeDtypeStruct((B, op), jnp.float32),
        grid=(pl.cdiv(B, tile_b),),
        in_specs=[
            pl.BlockSpec((tile_b, inp), lambda i: (i, 0)),   # x: streamed over batch
            _resident_spec((inp, hid_p)),                    # w1: VMEM-resident
            _resident_spec((1, hid_p)),                      # b1: VMEM-resident
            _resident_spec((hid_p, op)),                     # w2: VMEM-resident
            _resident_spec((1, op)),                         # b2: VMEM-resident
        ],
        out_specs=pl.BlockSpec((tile_b, op), lambda i: (i, 0)),
        compiler_params=pltpu.CompilerParams(
            dimension_semantics=("parallel",),
            vmem_limit_bytes=vmem_limit),
        cost_estimate=cost,
    )(x, w1p, b1p, w2p, b2p)

    return out


# ---------------------------------------------------------------------------
# Init mirroring the PyTorch module's __init__
# ---------------------------------------------------------------------------
def init_dan_params(key, inp_size, hid_size, op_size):
    """kaiming_uniform_ on weights (bound = sqrt(6/fan_in)),
       default nn.Linear bias init (uniform(+-1/sqrt(fan_in)))."""
    k1, k2, k3, k4 = jax.random.split(key, 4)

    bound_w1 = jnp.sqrt(6.0 / inp_size)
    w1 = jax.random.uniform(k1, (inp_size, hid_size), jnp.float32,
                            minval=-bound_w1, maxval=bound_w1)
    bound_b1 = 1.0 / jnp.sqrt(inp_size)
    b1 = jax.random.uniform(k2, (1, hid_size), jnp.float32,
                            minval=-bound_b1, maxval=bound_b1)

    bound_w2 = jnp.sqrt(6.0 / hid_size)
    w2 = jax.random.uniform(k3, (hid_size, op_size), jnp.float32,
                            minval=-bound_w2, maxval=bound_w2)
    bound_b2 = 1.0 / jnp.sqrt(hid_size)
    b2 = jax.random.uniform(k4, (1, op_size), jnp.float32,
                            minval=-bound_b2, maxval=bound_b2)
    return w1, b1, w2, b2


if __name__ == "__main__":
    batch, inp_size, hid_size, op_size = 8, 32, 64, 16

    key = jax.random.PRNGKey(0)
    kx, kp = jax.random.split(key)
    x = jax.random.normal(kx, (batch, inp_size), jnp.float32)
    w1, b1, w2, b2 = init_dan_params(kp, inp_size, hid_size, op_size)

    # Pad/cast weights ONCE (hoisted out of the per-call path).
    params = prepare_dan_params(w1, b1, w2, b2)

    out = dan_forward(x, *params)
    out = jax.block_until_ready(out)
    assert out.shape == (batch, op_size)

    # Tight reference: same bf16 matmul inputs with f32 accumulation/epilogue.
    x_bf, w1_bf, w2_bf = (x.astype(jnp.bfloat16), w1.astype(jnp.bfloat16),
                          w2.astype(jnp.bfloat16))
    h_ref = jnp.maximum(
        jnp.dot(x_bf, w1_bf, preferred_element_type=jnp.float32) + b1, 0.0)
    logits_ref = jnp.dot(h_ref.astype(jnp.bfloat16), w2_bf,
                         preferred_element_type=jnp.float32) + b2
    ref_bf = jax.nn.log_softmax(logits_ref, axis=1)
    assert jnp.allclose(out, ref_bf, atol=1e-3, rtol=1e-3)

    # Loose sanity check against the pure-f32 PyTorch-equivalent forward.
    ref_f32 = jax.nn.log_softmax(jnp.maximum(x @ w1 + b1, 0.0) @ w2 + b2, axis=1)
    assert jnp.allclose(out, ref_f32, atol=5e-2, rtol=5e-2)

    print("KERNEL_OK")
</pallas_src>

<mosaic_0001>
module attributes {stable_mosaic.version = 11 : i64} {
  func.func @dan_kernel(%arg0: i32, %arg1: memref<8x32xf32, #tpu.memory_space<vmem>>, %arg2: memref<32x128xbf16, #tpu.memory_space<vmem>>, %arg3: memref<1x128xf32, #tpu.memory_space<vmem>>, %arg4: memref<128x16xbf16, #tpu.memory_space<vmem>>, %arg5: memref<1x16xf32, #tpu.memory_space<vmem>>, %arg6: memref<8x16xf32, #tpu.memory_space<vmem>>) attributes {dimension_semantics = [#tpu.dimension_semantics<parallel>], iteration_bounds = array<i64: 1>, scalar_prefetch = 0 : i64, scratch_operands = 0 : i64, tpu.core_type = #tpu.core_type<tc>, window_params = [{transform_indices = @transform_0, window_bounds = array<i64: 8, 32>}, {pipeline_mode = #tpu.pipeline_mode<synchronous>, transform_indices = @transform_1, window_bounds = array<i64: 32, 128>}, {pipeline_mode = #tpu.pipeline_mode<synchronous>, transform_indices = @transform_2, window_bounds = array<i64: 1, 128>}, {pipeline_mode = #tpu.pipeline_mode<synchronous>, transform_indices = @transform_3, window_bounds = array<i64: 128, 16>}, {pipeline_mode = #tpu.pipeline_mode<synchronous>, transform_indices = @transform_4, window_bounds = array<i64: 1, 16>}, {transform_indices = @transform_5, window_bounds = array<i64: 8, 16>}]} {
    %c0 = arith.constant 0 : index
    %c0_0 = arith.constant 0 : index
    %0 = vector.load %arg1[%c0, %c0_0] : memref<8x32xf32, #tpu.memory_space<vmem>>, vector<8x32xf32>
    %1 = arith.truncf %0 : vector<8x32xf32> to vector<8x32xbf16>
    %c0_1 = arith.constant 0 : index
    %c0_2 = arith.constant 0 : index
    %2 = vector.load %arg2[%c0_1, %c0_2] : memref<32x128xbf16, #tpu.memory_space<vmem>>, vector<32x128xbf16>
    %cst = arith.constant dense<0.000000e+00> : vector<8x128xf32>
    %3 = tpu.matmul %1, %2, %cst {dimension_numbers = #tpu.dot_dimension_numbers<[1], [0], [0], [1], [0, 0, 1, 1], [], []>} : vector<8x32xbf16>, vector<32x128xbf16>, vector<8x128xf32> -> vector<8x128xf32>
    %c0_3 = arith.constant 0 : index
    %c0_4 = arith.constant 0 : index
    %4 = vector.load %arg3[%c0_3, %c0_4] : memref<1x128xf32, #tpu.memory_space<vmem>>, vector<1x128xf32>
    %5 = vector.broadcast %4 : vector<1x128xf32> to vector<8x128xf32>
    %6 = arith.addf %3, %5 : vector<8x128xf32>
    %cst_5 = arith.constant 0.000000e+00 : f32
    %7 = vector.broadcast %cst_5 : f32 to vector<8x128xf32>
    %8 = arith.maximumf %6, %7 : vector<8x128xf32>
    %9 = arith.truncf %8 : vector<8x128xf32> to vector<8x128xbf16>
    %c0_6 = arith.constant 0 : index
    %c0_7 = arith.constant 0 : index
    %10 = vector.load %arg4[%c0_6, %c0_7] : memref<128x16xbf16, #tpu.memory_space<vmem>>, vector<128x16xbf16>
    %cst_8 = arith.constant dense<0.000000e+00> : vector<8x16xf32>
    %11 = tpu.matmul %9, %10, %cst_8 {dimension_numbers = #tpu.dot_dimension_numbers<[1], [0], [0], [1], [0, 0, 1, 1], [], []>} : vector<8x128xbf16>, vector<128x16xbf16>, vector<8x16xf32> -> vector<8x16xf32>
    %c0_9 = arith.constant 0 : index
    %c0_10 = arith.constant 0 : index
    %12 = vector.load %arg5[%c0_9, %c0_10] : memref<1x16xf32, #tpu.memory_space<vmem>>, vector<1x16xf32>
    %13 = vector.broadcast %12 : vector<1x16xf32> to vector<8x16xf32>
    %14 = arith.addf %11, %13 : vector<8x16xf32>
    %cst_11 = arith.constant dense<0xFF800000> : vector<8xf32>
    %15 = vector.multi_reduction <maximumf>, %14, %cst_11 [1] : vector<8x16xf32> to vector<8xf32>
    %16 = vector.shape_cast %15 : vector<8xf32> to vector<8x1xf32>
    %17 = vector.broadcast %16 : vector<8x1xf32> to vector<8x16xf32>
    %18 = arith.subf %14, %17 : vector<8x16xf32>
    %19 = math.exp %18 : vector<8x16xf32>
    %cst_12 = arith.constant dense<0.000000e+00> : vector<8xf32>
    %20 = vector.multi_reduction <add>, %19, %cst_12 [1] : vector<8x16xf32> to vector<8xf32>
    %21 = vector.shape_cast %20 : vector<8xf32> to vector<8x1xf32>
    %22 = math.log %21 : vector<8x1xf32>
    %23 = vector.broadcast %22 : vector<8x1xf32> to vector<8x16xf32>
    %24 = arith.subf %18, %23 : vector<8x16xf32>
    %c0_13 = arith.constant 0 : index
    %c0_14 = arith.constant 0 : index
    %25 = vector.load %arg6[%c0_13, %c0_14] : memref<8x16xf32, #tpu.memory_space<vmem>>, vector<8x16xf32>
    tpu.vector_store %arg6[%c0_13, %c0_14], %24 {strides = array<i32>} : memref<8x16xf32, #tpu.memory_space<vmem>>, vector<8x16xf32>,
    return
  }
  func.func @transform_0(%arg0: i32) -> (i32, i32) {
    %c0_i32 = arith.constant 0 : i32
    %c0_i32_0 = arith.constant 0 : i32
    return %arg0, %c0_i32 : i32, i32
  }
  func.func @transform_1(%arg0: i32) -> (i32, i32) {
    %c0_i32 = arith.constant 0 : i32
    %c0_i32_0 = arith.constant 0 : i32
    %c0_i32_1 = arith.constant 0 : i32
    return %c0_i32, %c0_i32_0 : i32, i32
  }
  func.func @transform_2(%arg0: i32) -> (i32, i32) {
    %c0_i32 = arith.constant 0 : i32
    %c0_i32_0 = arith.constant 0 : i32
    %c0_i32_1 = arith.constant 0 : i32
    return %c0_i32, %c0_i32_0 : i32, i32
  }
  func.func @transform_3(%arg0: i32) -> (i32, i32) {
    %c0_i32 = arith.constant 0 : i32
    %c0_i32_0 = arith.constant 0 : i32
    %c0_i32_1 = arith.constant 0 : i32
    return %c0_i32, %c0_i32_0 : i32, i32
  }
  func.func @transform_4(%arg0: i32) -> (i32, i32) {
    %c0_i32 = arith.constant 0 : i32
    %c0_i32_0 = arith.constant 0 : i32
    %c0_i32_1 = arith.constant 0 : i32
    return %c0_i32, %c0_i32_0 : i32, i32
  }
  func.func @transform_5(%arg0: i32) -> (i32, i32) {
    %c0_i32 = arith.constant 0 : i32
    %c0_i32_0 = arith.constant 0 : i32
    return %arg0, %c0_i32 : i32, i32
  }
}

</mosaic_0001>

<llo_original>
// kernel: tpu_custom_call.1
$region0: #{tpu_custom_call.1}
  #allocation0 [shape = 'u32[]', space=smem, size = 0x4, offset = 0x4, fixed_abs, tag = 'smem constant byte address 0x4 - core index']
  #allocation1 [shape = 'u32[144,128]{1,0:T(1,128)}', space=vmem, size = 0x12000, scoped, tag = 'internal scratch']
  %s0 = inlined_call_operand.vmem [shape: f32[8,32], index: 0, kind: input, shape index: {}]
  %s1 = inlined_call_operand.vmem [shape: bf16[32,128], index: 1, kind: input, shape index: {}]
  %s2 = inlined_call_operand.vmem [shape: f32[1,128], index: 2, kind: input, shape index: {}]
  %s3 = inlined_call_operand.vmem [shape: bf16[128,16], index: 3, kind: input, shape index: {}]
  %s4 = inlined_call_operand.vmem [shape: f32[1,16], index: 4, kind: input, shape index: {}]
  %s5 = inlined_call_operand.hbm [shape: f32[8,16], index: 5, kind: output, shape index: {}]
  %s6 = sld [smem:[#allocation0]]
  $region30: #{tpu_custom_call.1} parent=0
    _
  %s8 = ssub.s32 1, %s6
  %s9 = scalar_select 0, %s8, %s6
  $region1: #{tpu_custom_call.1} parent=0
    #allocation2 [shape = 'u8[4096]{0}', space=vmem, size = 0x1000, scoped, tag = 'output window, operand 0, single buffered']
    #allocation3 [shape = 's32[1]{0}', space=sflag, size = 0x4, scoped, tag = 'scoped memory for tpu_custom_call.1']
    %10 = vsyncpa [#allocation3], 0
    // Predicated region
    $region2: #{tpu_custom_call.1} parent=1 // pred_check
      _
    $region3: #{tpu_custom_call.1} parent=1 // pred_check_branch
      %12 = sbr.rel (0) target = $region5
    $region4: #{tpu_custom_call.1} parent=1 // pred_region
      _
    $region5: #{tpu_custom_call.1} parent=1 // pred_fallthru
      _
    // Predicated region
    $region6: #{tpu_custom_call.1} parent=1 // pred_check
      _
    $region7: #{tpu_custom_call.1} parent=1 // pred_check_branch
      %14 = sbr.rel (0) target = $region9
    $region8: #{tpu_custom_call.1} parent=1 // pred_region
      _
    $region9: #{tpu_custom_call.1} parent=1 // pred_fallthru
      _
    // Predicated region
    $region10: #{tpu_custom_call.1} parent=1 // pred_check
      _
    $region11: #{tpu_custom_call.1} parent=1 // pred_check_branch
      %16 = sbr.rel (0) target = $region13
    $region12: #{tpu_custom_call.1} parent=1 // pred_region
      _
    $region13: #{tpu_custom_call.1} parent=1 // pred_fallthru
      _
    // Predicated region
    $region14: #{tpu_custom_call.1} parent=1 // pred_check
      _
    $region15: #{tpu_custom_call.1} parent=1 // pred_check_branch
      %18 = sbr.rel (0) target = $region17
    $region16: #{tpu_custom_call.1} parent=1 // pred_region
      _
    $region17: #{tpu_custom_call.1} parent=1 // pred_fallthru
      _
    // Predicated region
    $region18: #{tpu_custom_call.1} parent=1 // pred_check
      _
    $region19: #{tpu_custom_call.1} parent=1 // pred_check_branch
      %20 = sbr.rel (0) target = $region21
    $region20: #{tpu_custom_call.1} parent=1 // pred_region
      _
    $region21: #{tpu_custom_call.1} parent=1 // pred_fallthru
      _
    %v22 = vld [vmem:[%s0] sm:$0xff]
    %v23 = vpack.c.bf16 %v22, %v22
    %v24 = vld [vmem:[%s1] sm:$0xf]
    %v25 = vld [vmem:[%s1 + $0x4] sm:$0xf]
    %v26 = vld [vmem:[%s1 + $0x8] sm:$0xf]
    %v27 = vld [vmem:[%s1 + $0xc] sm:$0xf]
    %v28 = vld [vmem:[%s2] sm:$0x1]
    %v30 = vlaneseq
    %v31 = vshrl.u32 %v30, 7
    %v32 = vsub.s32 0, %v31
    %v33 = vrot.slane %v28, %v32
    %v39 = vunpack.c.l.b16 %v24
    %v40 = vunpack.c.l.b16 %v25
    %v41 = vunpack.c.l.b16 %v26
    %v42 = vunpack.c.l.b16 %v27
    %v43 = vpack.c.b16 %v40, %v39
    %v44 = vpack.c.b16 %v42, %v41
    %vm47 = vcmask 261120
    %v49 = vsel %vm47, %v23, 0
    %51 = vmatprep.subr.bf16.mxu0 0
    %52 = vmatpush1.bf16.msra.mxu0 %v43
    %53 = vmatprep.subr.bf16.mxu0 0
    %54 = vmatpush1.bf16.msra.mxu0 %v44
    %55 = vmatprep.subr.bf16.mxu0 0
    %56 = vmatpush1.bf16.msra.mxu0 0
    %57 = vmatprep.subr.bf16.mxu0 0
    %58 = vmatpush1.bf16.msra.mxu0 0
    %59 = vmatprep.subr.bf16.mxu0 0
    %60 = vmatpush1.bf16.msra.mxu0 0
    %61 = vmatprep.subr.bf16.mxu0 0
    %62 = vmatpush1.bf16.msra.mxu0 0
    %63 = vmatprep.subr.bf16.mxu0 0
    %64 = vmatpush1.bf16.msra.mxu0 0
    %65 = vmatprep.subr.bf16.mxu0 0
    %66 = vmatpush1.bf16.msra.mxu0 0
    %67 = vmatprep.subr.bf16.mxu0 0
    %68 = vmatpush1.bf16.msra.mxu0 0
    %69 = vmatprep.subr.bf16.mxu0 0
    %70 = vmatpush1.bf16.msra.mxu0 0
    %71 = vmatprep.subr.bf16.mxu0 0
    %72 = vmatpush1.bf16.msra.mxu0 0
    %73 = vmatprep.subr.bf16.mxu0 0
    %74 = vmatpush1.bf16.msra.mxu0 0
    %75 = vmatprep.subr.bf16.mxu0 0
    %76 = vmatpush1.bf16.msra.mxu0 0
    %77 = vmatprep.subr.bf16.mxu0 0
    %78 = vmatpush1.bf16.msra.mxu0 0
    %79 = vmatprep.subr.bf16.mxu0 0
    %80 = vmatpush1.bf16.msra.mxu0 0
    %81 = vmatprep.subr.bf16.mxu0 0
    %82 = vmatpush1.bf16.msra.mxu0 0
    %83 = vmatprep.mubr.bf16.mxu0 0
    %84 = vmatmul.mubr.bf16.gmra.mrb[0].mxu0 %v49
    %v85 = vpop.f32.mrb[0].mxu0
    %v86 = vadd.f32 %v33, %v85
    %v87 = vpop.f32.mrb[0].mxu0
    %v88 = vpop.f32.mrb[0].mxu0
    %v89 = vpop.f32.mrb[0].mxu0
    %90 = vdwg.mxu0
    %v91 = vmax.f32 %v86, 0.0
    %v92 = vpack.c.bf16 %v91, %v91
    %v93 = vld [vmem:[%s3] sm:$0xf]
    %v94 = vld [vmem:[%s3 + $0x4] sm:$0xf]
    %v95 = vld [vmem:[%s3 + $0x8] sm:$0xf]
    %v96 = vld [vmem:[%s3 + $0xc] sm:$0xf]
    %v97 = vld [vmem:[%s3 + $0x10] sm:$0xf]
    %v98 = vld [vmem:[%s3 + $0x14] sm:$0xf]
    %v99 = vld [vmem:[%s3 + $0x18] sm:$0xf]
    %v100 = vld [vmem:[%s3 + $0x1c] sm:$0xf]
    %v101 = vld [vmem:[%s3 + $0x20] sm:$0xf]
    %v102 = vld [vmem:[%s3 + $0x24] sm:$0xf]
    %v103 = vld [vmem:[%s3 + $0x28] sm:$0xf]
    %v104 = vld [vmem:[%s3 + $0x2c] sm:$0xf]
    %v105 = vld [vmem:[%s3 + $0x30] sm:$0xf]
    %v106 = vld [vmem:[%s3 + $0x34] sm:$0xf]
    %v107 = vld [vmem:[%s3 + $0x38] sm:$0xf]
    %v108 = vld [vmem:[%s3 + $0x3c] sm:$0xf]
    %v109 = vld [vmem:[%s4] sm:$0x1]
    %v111 = vlaneseq
    %v112 = vshrl.u32 %v111, 7
    %v113 = vsub.s32 0, %v112
    %v114 = vrot.slane %v109, %v113
    %v132 = vunpack.c.l.b16 %v93
    %v133 = vunpack.c.l.b16 %v94
    %v134 = vunpack.c.l.b16 %v95
    %v135 = vunpack.c.l.b16 %v96
    %v136 = vunpack.c.l.b16 %v97
    %v137 = vunpack.c.l.b16 %v98
    %v138 = vunpack.c.l.b16 %v99
    %v139 = vunpack.c.l.b16 %v100
    %v140 = vunpack.c.l.b16 %v101
    %v141 = vunpack.c.l.b16 %v102
    %v142 = vunpack.c.l.b16 %v103
    %v143 = vunpack.c.l.b16 %v104
    %v144 = vunpack.c.l.b16 %v105
    %v145 = vunpack.c.l.b16 %v106
    %v146 = vunpack.c.l.b16 %v107
    %v147 = vunpack.c.l.b16 %v108
    %v148 = vpack.c.b16 %v133, %v132
    %v149 = vpack.c.b16 %v135, %v134
    %v150 = vpack.c.b16 %v137, %v136
    %v151 = vpack.c.b16 %v139, %v138
    %v152 = vpack.c.b16 %v141, %v140
    %v153 = vpack.c.b16 %v143, %v142
    %v154 = vpack.c.b16 %v145, %v144
    %v155 = vpack.c.b16 %v147, %v146
    %164 = vmatprep.subr.bf16.mxu0 0
    %165 = vmatpush1.bf16.msra.mxu0 %v148
    %166 = vmatprep.subr.bf16.mxu0 0
    %167 = vmatpush1.bf16.msra.mxu0 %v149
    %168 = vmatprep.subr.bf16.mxu0 0
    %169 = vmatpush1.bf16.msra.mxu0 %v150
    %170 = vmatprep.subr.bf16.mxu0 0
    %171 = vmatpush1.bf16.msra.mxu0 %v151
    %172 = vmatprep.subr.bf16.mxu0 0
    %173 = vmatpush1.bf16.msra.mxu0 %v152
    %174 = vmatprep.subr.bf16.mxu0 0
    %175 = vmatpush1.bf16.msra.mxu0 %v153
    %176 = vmatprep.subr.bf16.mxu0 0
    %177 = vmatpush1.bf16.msra.mxu0 %v154
    %178 = vmatprep.subr.bf16.mxu0 0
    %179 = vmatpush1.bf16.msra.mxu0 %v155
    %180 = vmatprep.subr.bf16.mxu0 0
    %181 = vmatpush1.bf16.msra.mxu0 0
    %182 = vmatprep.subr.bf16.mxu0 0
    %183 = vmatpush1.bf16.msra.mxu0 0
    %184 = vmatprep.subr.bf16.mxu0 0
    %185 = vmatpush1.bf16.msra.mxu0 0
    %186 = vmatprep.subr.bf16.mxu0 0
    %187 = vmatpush1.bf16.msra.mxu0 0
    %188 = vmatprep.subr.bf16.mxu0 0
    %189 = vmatpush1.bf16.msra.mxu0 0
    %190 = vmatprep.subr.bf16.mxu0 0
    %191 = vmatpush1.bf16.msra.mxu0 0
    %192 = vmatprep.subr.bf16.mxu0 0
    %193 = vmatpush1.bf16.msra.mxu0 0
    %194 = vmatprep.subr.bf16.mxu0 0
    %195 = vmatpush1.bf16.msra.mxu0 0
    %196 = vmatprep.mubr.bf16.mxu0 0
    %197 = vmatmul.mubr.bf16.gmra.mrb[0].mxu0 %v92
    %v198 = vpop.f32.mrb[0].mxu0
    %v199 = vadd.f32 %v114, %v198
    %v200 = vpop.f32.mrb[0].mxu0
    %v201 = vpop.f32.mrb[0].mxu0
    %v202 = vpop.f32.mrb[0].mxu0
    %203 = vdwg.mxu0
    %vm204 = vcmask 130048
    %v205 = vsel %vm204, %v199, -inf
    %206 = vmax.xlane.f32.xlu0 %v205
    %v207 = vpop.xlane.xlu0 %206
    %v208 = vsub.f32 %v199, %v207
    %v209 = vmul.f32 %v208, 1.442695
    %v210 = vpow.pop %v209
    %v211 = vsel %vm204, %v210, 0.0
    %212 = vadd.xlane.f32.xlu0 %v211
    %v213 = vpop.xlane.xlu0 %212
    %v214 = vlog2.pop %v213
    %v215 = vmul.f32 %v214, 0.6931472
    %v216 = vsub.f32 %v208, %v215
    %217 = vst.msk [vmem:[#allocation2] sm:$0xff] %vm204, %v216
    // Predicated region
    $region22: #{tpu_custom_call.1} parent=1 // pred_check
      _
    $region23: #{tpu_custom_call.1} parent=1 // pred_check_branch
      %219 = sbr.rel (0) target = $region25
    $region24: #{tpu_custom_call.1} parent=1 // pred_region
      %s221 = ssub.s32 128, 128
      %222 = vsyncadd [#allocation3], %s221
      %s224 = sshll.u32 [#allocation2], 4
      %s225 = int_to_ptr.vmem [resolvable:$true] %s224
      %227 = dma.vmem_to_hbm [thread:$0]  %s225, 128, %s5, [#allocation3]
    $region25: #{tpu_custom_call.1} parent=1 // pred_fallthru
      _
    // Predicated region
    $region26: #{tpu_custom_call.1} parent=1 // pred_check
      _
    $region27: #{tpu_custom_call.1} parent=1 // pred_check_branch
      %229 = sbr.rel (0) target = $region29
    $region28: #{tpu_custom_call.1} parent=1 // pred_region
      %230 = dma.done [#allocation3], 128
    $region29: #{tpu_custom_call.1} parent=1 // pred_fallthru
      _
    %231 = vsyncpa [#allocation3], 1

</llo_original>
